<compile_context>
chip_gen: v5e
topology: v5e:2x2
jax: 0.10.0
libtpu: 0.0.40
codegen_flags: <defaults>
</compile_context>

<pallas_src>
import functools

import jax
import jax.numpy as jnp
from jax.experimental import pallas as pl
from jax.experimental.pallas import tpu as pltpu


def _round_up(n, m):
    return (n + m - 1) // m * m


def _default_act_dtype():
    """bf16 activations on bf16-capable VPUs (v6e/v7x); f32 elsewhere (v5e/v5p/v4)."""
    try:
        kind = jax.devices()[0].device_kind.lower()
    except Exception:
        return jnp.float32
    if "v6" in kind or "v7" in kind:
        return jnp.bfloat16
    return jnp.float32


def _leaky_relu(x, slope=0.2):
    # max-form: mul + max (2 VALU ops) instead of cmp + mul + select (3).
    return jnp.maximum(x, slope * x)


def _mlp_kernel(x_ref,
                w1_ref, b1_ref,
                w2_ref, b2_ref,
                w3_ref, b3_ref,
                w4_ref, b4_ref,
                o_ref):
    # x tile: (bt, D) f32 -> bf16 MXU operands, f32 accumulation.
    x = x_ref[...].astype(jnp.bfloat16)
    act_dtype = b1_ref.dtype  # bf16 on v6e/v7x, f32 on v5e (set by prepare_params)

    # Linear(D, 512) + LeakyReLU(0.2)
    h = jnp.dot(x, w1_ref[...], preferred_element_type=jnp.float32)
    h = h.astype(act_dtype) + b1_ref[...]
    h = _leaky_relu(h)
    # Dropout(0.3) -> identity (inference semantics)
    # TODO(synk): training-mode dropout (stateful PRNG mask) not implemented; eval semantics only.

    # Linear(512, 256) + LeakyReLU(0.2)
    h = jnp.dot(h.astype(jnp.bfloat16), w2_ref[...],
                preferred_element_type=jnp.float32)
    h = h.astype(act_dtype) + b2_ref[...]
    h = _leaky_relu(h)

    # Linear(256, 128) + LeakyReLU(0.2)
    h = jnp.dot(h.astype(jnp.bfloat16), w3_ref[...],
                preferred_element_type=jnp.float32)
    h = h.astype(act_dtype) + b3_ref[...]
    h = _leaky_relu(h)

    # Linear(128, 1) + Sigmoid, computed transposed so the result is lane-dense:
    # w4_ref is (8, 128) bf16 with the real weight row in row 0 (rows 1..7 zero).
    # Contract over the 128-feature axis -> (8, bt); row 0 holds logits for the tile.
    # (This layer is <1% of total FLOPs; any activation transpose it implies goes
    #  through the XLU slot and stays off the VALU/MXU critical path.)
    logits8 = jax.lax.dot_general(
        w4_ref[...], h.astype(jnp.bfloat16),
        dimension_numbers=(((1,), (1,)), ((), ())),
        preferred_element_type=jnp.float32)          # (8, bt)
    logits = logits8[0:1, :] + b4_ref[...]           # (1, bt), bias broadcast (f32)
    # o_ref block is (1, 1, bt); write the lane-dense row.
    o_ref[0] = jax.nn.sigmoid(logits).astype(o_ref.dtype)


def prepare_params(params, act_dtype=None):
    """Pre-cast / pre-pack parameters once, outside the jitted forward call.

    Weights w1..w3 -> bf16 MXU operands; w4 -> zero-padded (8,128) bf16 row block
    for the transposed last layer; biases b1..b3 -> activation dtype (bf16 on
    v6e/v7x, f32 on v5e); b4 stays f32 (added to f32 logits before sigmoid).
    """
    if act_dtype is None:
        act_dtype = _default_act_dtype()
    w4r = (jnp.zeros((8, 128), jnp.float32)
           .at[0, :].set(params["w4"][:, 0])
           .astype(jnp.bfloat16))
    return {
        "w1": params["w1"].astype(jnp.bfloat16),
        "w2": params["w2"].astype(jnp.bfloat16),
        "w3": params["w3"].astype(jnp.bfloat16),
        "w4r": w4r,
        "b1": params["b1"].astype(act_dtype),
        "b2": params["b2"].astype(act_dtype),
        "b3": params["b3"].astype(act_dtype),
        "b4": params["b4"].astype(jnp.float32),
    }


@functools.partial(jax.jit, static_argnames=("batch_tile",))
def tabular_discriminator(x, prepped, batch_tile=1024):
    """x: (B, input_dim) float32. prepped: output of prepare_params.

    Returns (B, 1) float32 in [0, 1].

    batch_tile: max rows per grid step (rounded to a 256-multiple: fills the
    256x256 MXUs on v6e/v7x and is a 128-multiple for v5e). Small batches
    collapse to a single 8-aligned block; batches larger than batch_tile split
    into >=2 tiles so the parallel grid axis can use both v7x TensorCores.
    """
    B, D = x.shape
    batch_tile = _round_up(max(batch_tile, 256), 256)
    B8 = _round_up(B, 8)
    if B8 <= batch_tile:
        bt = B8                       # single block, no grid overhead
    else:
        # >= 2 tiles of <= batch_tile rows, 256-row multiples.
        bt = min(batch_tile, _round_up(pl.cdiv(B8, 2), 256))
    pad = (-B) % bt
    Bp = B + pad
    n_tiles = Bp // bt
    if pad:
        x = jnp.pad(x, ((0, pad), (0, 0)))

    w1, w2, w3, w4r = prepped["w1"], prepped["w2"], prepped["w3"], prepped["w4r"]
    b1, b2, b3, b4 = prepped["b1"], prepped["b2"], prepped["b3"], prepped["b4"]

    def full2d(arr):
        return pl.BlockSpec(arr.shape, lambda i: (0, 0))

    # Explicit scoped-VMEM budget sized from the tile: x + bf16 weights (double
    # buffered) + f32 dot results + bf16 copies of intermediates + output tile.
    act_bytes = jnp.dtype(b1.dtype).itemsize
    inter_cols = 512 + 256 + 128
    vmem_bytes = (
        2 * bt * D * 4
        + 2 * 2 * (D * 512 + 512 * 256 + 256 * 128 + 8 * 128)
        + act_bytes * inter_cols + 4 * 128
        + bt * inter_cols * (4 + 2)
        + 2 * bt * 4 * 8
    )
    # Above v5e's 16 MiB / v6e-v7x's 32 MiB scoped defaults, below v7x's 64 MiB physical.
    vmem_limit = int(min(max(2 * vmem_bytes, 32 << 20), 48 << 20))
    # TODO(synk): for very large input_dim (thousands of features) add a K-tiled
    # reduction grid axis for the first matmul instead of holding w1 as one block.

    flops = 2 * Bp * (D * 512 + 512 * 256 + 256 * 128 + 128 * 1)
    bytes_accessed = (Bp * D * 4 + Bp * 4
                      + 2 * (w1.size + w2.size + w3.size + w4r.size)
                      + act_bytes * (b1.size + b2.size + b3.size) + 4 * b4.size)

    out = pl.pallas_call(
        _mlp_kernel,
        out_shape=jax.ShapeDtypeStruct((n_tiles, 1, bt), jnp.float32),
        grid_spec=pltpu.PrefetchScalarGridSpec(
            num_scalar_prefetch=0,
            grid=(n_tiles,),
            in_specs=[
                pl.BlockSpec((bt, D), lambda i: (i, 0)),
                full2d(w1), full2d(b1),
                full2d(w2), full2d(b2),
                full2d(w3), full2d(b3),
                full2d(w4r), full2d(b4),
            ],
            out_specs=pl.BlockSpec((1, 1, bt), lambda i: (i, 0, 0)),
        ),
        compiler_params=pltpu.CompilerParams(
            dimension_semantics=("parallel",),
            vmem_limit_bytes=vmem_limit,
        ),
        cost_estimate=pl.CostEstimate(
            flops=flops, transcendentals=2 * Bp, bytes_accessed=bytes_accessed),
    )(x, w1, b1, w2, b2, w3, b3, w4r, b4)

    # Padded rows never leak: reshape to batch order, then slice to B.
    return out.reshape(Bp, 1)[:B]


def init_params(key, input_dim):
    """Deterministic f32 init mimicking nn.Linear default (U(-1/sqrt(fan_in), +1/sqrt(fan_in)))."""
    dims = [input_dim, 512, 256, 128, 1]
    params = {}
    for idx, (din, dout) in enumerate(zip(dims[:-1], dims[1:]), start=1):
        key, kw, kb = jax.random.split(key, 3)
        bound = 1.0 / (din ** 0.5)
        # stored as (in, out) for x @ W
        params[f"w{idx}"] = jax.random.uniform(
            kw, (din, dout), jnp.float32, minval=-bound, maxval=bound)
        params[f"b{idx}"] = jax.random.uniform(
            kb, (1, dout), jnp.float32, minval=-bound, maxval=bound)
    return params


def _reference(x, params):
    h = x @ params["w1"] + params["b1"]
    h = jnp.where(h > 0, h, 0.2 * h)
    h = h @ params["w2"] + params["b2"]
    h = jnp.where(h > 0, h, 0.2 * h)
    h = h @ params["w3"] + params["b3"]
    h = jnp.where(h > 0, h, 0.2 * h)
    h = h @ params["w4"] + params["b4"]
    return jax.nn.sigmoid(h)


if __name__ == "__main__":
    key = jax.random.PRNGKey(0)
    k_param, k_x1, k_x2 = jax.random.split(key, 3)

    input_dim = 32
    params = init_params(k_param, input_dim)
    prepped = prepare_params(params)

    # Small batch (exercises sublane padding + single-block fast path).
    x_small = jax.random.normal(k_x1, (13, input_dim), jnp.float32)
    out_small = jax.block_until_ready(tabular_discriminator(x_small, prepped))
    ref_small = _reference(x_small, params)
    assert out_small.shape == (13, 1)
    assert jnp.allclose(out_small, ref_small, atol=1e-2), "small-batch mismatch vs reference"

    # Multi-tile path: force a small 256-row tile so 600 rows -> 3 grid steps
    # (padded batch, lane-dense output row stores, parallel grid axis).
    x_big = jax.random.normal(k_x2, (600, input_dim), jnp.float32)
    out_big = jax.block_until_ready(tabular_discriminator(x_big, prepped, batch_tile=256))
    ref_big = _reference(x_big, params)
    assert out_big.shape == (600, 1)
    assert jnp.allclose(out_big, ref_big, atol=1e-2), "multi-tile mismatch vs reference"

    # Default large tile on the same batch collapses to a single block.
    out_big2 = jax.block_until_ready(tabular_discriminator(x_big, prepped))
    assert out_big2.shape == (600, 1)
    assert jnp.allclose(out_big2, ref_big, atol=1e-2), "single-block large-tile mismatch"

    print("KERNEL_OK")
</pallas_src>

<mosaic_0001>
module attributes {stable_mosaic.version = 11 : i64} {
  func.func @_mlp_kernel(%arg0: i32, %arg1: memref<16x32xf32, #tpu.memory_space<vmem>>, %arg2: memref<32x512xbf16, #tpu.memory_space<vmem>>, %arg3: memref<1x512xf32, #tpu.memory_space<vmem>>, %arg4: memref<512x256xbf16, #tpu.memory_space<vmem>>, %arg5: memref<1x256xf32, #tpu.memory_space<vmem>>, %arg6: memref<256x128xbf16, #tpu.memory_space<vmem>>, %arg7: memref<1x128xf32, #tpu.memory_space<vmem>>, %arg8: memref<8x128xbf16, #tpu.memory_space<vmem>>, %arg9: memref<1x1xf32, #tpu.memory_space<vmem>>, %arg10: memref<1x1x16xf32, #tpu.memory_space<vmem>>) attributes {dimension_semantics = [#tpu.dimension_semantics<parallel>], iteration_bounds = array<i64: 1>, scalar_prefetch = 0 : i64, scratch_operands = 0 : i64, tpu.core_type = #tpu.core_type<tc>, window_params = [{transform_indices = @transform_0, window_bounds = array<i64: 16, 32>}, {pipeline_mode = #tpu.pipeline_mode<synchronous>, transform_indices = @transform_1, window_bounds = array<i64: 32, 512>}, {pipeline_mode = #tpu.pipeline_mode<synchronous>, transform_indices = @transform_2, window_bounds = array<i64: 1, 512>}, {pipeline_mode = #tpu.pipeline_mode<synchronous>, transform_indices = @transform_3, window_bounds = array<i64: 512, 256>}, {pipeline_mode = #tpu.pipeline_mode<synchronous>, transform_indices = @transform_4, window_bounds = array<i64: 1, 256>}, {pipeline_mode = #tpu.pipeline_mode<synchronous>, transform_indices = @transform_5, window_bounds = array<i64: 256, 128>}, {pipeline_mode = #tpu.pipeline_mode<synchronous>, transform_indices = @transform_6, window_bounds = array<i64: 1, 128>}, {pipeline_mode = #tpu.pipeline_mode<synchronous>, transform_indices = @transform_7, window_bounds = array<i64: 8, 128>}, {pipeline_mode = #tpu.pipeline_mode<synchronous>, transform_indices = @transform_8, window_bounds = array<i64: 1, 1>}, {transform_indices = @transform_9, window_bounds = array<i64: 1, 1, 16>}]} {
    %c0 = arith.constant 0 : index
    %c0_0 = arith.constant 0 : index
    %0 = vector.load %arg1[%c0, %c0_0] : memref<16x32xf32, #tpu.memory_space<vmem>>, vector<16x32xf32>
    %1 = arith.truncf %0 : vector<16x32xf32> to vector<16x32xbf16>
    %c0_1 = arith.constant 0 : index
    %c0_2 = arith.constant 0 : index
    %2 = vector.load %arg2[%c0_1, %c0_2] : memref<32x512xbf16, #tpu.memory_space<vmem>>, vector<32x512xbf16>
    %cst = arith.constant dense<0.000000e+00> : vector<16x512xf32>
    %3 = tpu.matmul %1, %2, %cst {dimension_numbers = #tpu.dot_dimension_numbers<[1], [0], [0], [1], [0, 0, 1, 1], [], []>} : vector<16x32xbf16>, vector<32x512xbf16>, vector<16x512xf32> -> vector<16x512xf32>
    %c0_3 = arith.constant 0 : index
    %c0_4 = arith.constant 0 : index
    %4 = vector.load %arg3[%c0_3, %c0_4] : memref<1x512xf32, #tpu.memory_space<vmem>>, vector<1x512xf32>
    %5 = vector.broadcast %4 : vector<1x512xf32> to vector<16x512xf32>
    %6 = arith.addf %3, %5 : vector<16x512xf32>
    %cst_5 = arith.constant 2.000000e-01 : f32
    %7 = vector.broadcast %cst_5 : f32 to vector<16x512xf32>
    %8 = arith.mulf %7, %6 : vector<16x512xf32>
    %9 = arith.maximumf %6, %8 : vector<16x512xf32>
    %10 = arith.truncf %9 : vector<16x512xf32> to vector<16x512xbf16>
    %c0_6 = arith.constant 0 : index
    %c0_7 = arith.constant 0 : index
    %11 = vector.load %arg4[%c0_6, %c0_7] : memref<512x256xbf16, #tpu.memory_space<vmem>>, vector<512x256xbf16>
    %cst_8 = arith.constant dense<0.000000e+00> : vector<16x256xf32>
    %12 = tpu.matmul %10, %11, %cst_8 {dimension_numbers = #tpu.dot_dimension_numbers<[1], [0], [0], [1], [0, 0, 1, 1], [], []>} : vector<16x512xbf16>, vector<512x256xbf16>, vector<16x256xf32> -> vector<16x256xf32>
    %c0_9 = arith.constant 0 : index
    %c0_10 = arith.constant 0 : index
    %13 = vector.load %arg5[%c0_9, %c0_10] : memref<1x256xf32, #tpu.memory_space<vmem>>, vector<1x256xf32>
    %14 = vector.broadcast %13 : vector<1x256xf32> to vector<16x256xf32>
    %15 = arith.addf %12, %14 : vector<16x256xf32>
    %cst_11 = arith.constant 2.000000e-01 : f32
    %16 = vector.broadcast %cst_11 : f32 to vector<16x256xf32>
    %17 = arith.mulf %16, %15 : vector<16x256xf32>
    %18 = arith.maximumf %15, %17 : vector<16x256xf32>
    %19 = arith.truncf %18 : vector<16x256xf32> to vector<16x256xbf16>
    %c0_12 = arith.constant 0 : index
    %c0_13 = arith.constant 0 : index
    %20 = vector.load %arg6[%c0_12, %c0_13] : memref<256x128xbf16, #tpu.memory_space<vmem>>, vector<256x128xbf16>
    %cst_14 = arith.constant dense<0.000000e+00> : vector<16x128xf32>
    %21 = tpu.matmul %19, %20, %cst_14 {dimension_numbers = #tpu.dot_dimension_numbers<[1], [0], [0], [1], [0, 0, 1, 1], [], []>} : vector<16x256xbf16>, vector<256x128xbf16>, vector<16x128xf32> -> vector<16x128xf32>
    %c0_15 = arith.constant 0 : index
    %c0_16 = arith.constant 0 : index
    %22 = vector.load %arg7[%c0_15, %c0_16] : memref<1x128xf32, #tpu.memory_space<vmem>>, vector<1x128xf32>
    %23 = vector.broadcast %22 : vector<1x128xf32> to vector<16x128xf32>
    %24 = arith.addf %21, %23 : vector<16x128xf32>
    %cst_17 = arith.constant 2.000000e-01 : f32
    %25 = vector.broadcast %cst_17 : f32 to vector<16x128xf32>
    %26 = arith.mulf %25, %24 : vector<16x128xf32>
    %27 = arith.maximumf %24, %26 : vector<16x128xf32>
    %c0_18 = arith.constant 0 : index
    %c0_19 = arith.constant 0 : index
    %28 = vector.load %arg8[%c0_18, %c0_19] : memref<8x128xbf16, #tpu.memory_space<vmem>>, vector<8x128xbf16>
    %29 = arith.truncf %27 : vector<16x128xf32> to vector<16x128xbf16>
    %cst_20 = arith.constant dense<0.000000e+00> : vector<8x16xf32>
    %30 = tpu.matmul %28, %29, %cst_20 {dimension_numbers = #tpu.dot_dimension_numbers<[1], [1], [0], [0], [0, 0, 1, 0], [], []>} : vector<8x128xbf16>, vector<16x128xbf16>, vector<8x16xf32> -> vector<8x16xf32>
    %31 = vector.extract_strided_slice %30 {offsets = [0, 0], sizes = [1, 16], strides = [1, 1]} : vector<8x16xf32> to vector<1x16xf32>
    %c0_21 = arith.constant 0 : index
    %c0_22 = arith.constant 0 : index
    %32 = vector.load %arg9[%c0_21, %c0_22] : memref<1x1xf32, #tpu.memory_space<vmem>>, vector<1x1xf32>
    %33 = vector.broadcast %32 : vector<1x1xf32> to vector<1x16xf32>
    %34 = arith.addf %31, %33 : vector<1x16xf32>
    %35 = arith.negf %34 : vector<1x16xf32>
    %36 = math.exp %35 : vector<1x16xf32>
    %cst_23 = arith.constant 1.000000e+00 : f32
    %37 = vector.broadcast %cst_23 : f32 to vector<1x16xf32>
    %38 = arith.addf %37, %36 : vector<1x16xf32>
    %39 = arith.divf %37, %38 : vector<1x16xf32>
    %c0_24 = arith.constant 0 : index
    %c0_25 = arith.constant 0 : index
    %c0_26 = arith.constant 0 : index
    %40 = vector.load %arg10[%c0_24, %c0_25, %c0_26] : memref<1x1x16xf32, #tpu.memory_space<vmem>>, vector<1x1x16xf32>
    %41 = vector.shape_cast %40 : vector<1x1x16xf32> to vector<1x16xf32>
    %42 = vector.shape_cast %39 : vector<1x16xf32> to vector<1x1x16xf32>
    tpu.vector_store %arg10[%c0_24, %c0_25, %c0_26], %42 {strides = array<i32>} : memref<1x1x16xf32, #tpu.memory_space<vmem>>, vector<1x1x16xf32>,
    return
  }
  func.func @transform_0(%arg0: i32) -> (i32, i32) {
    %c0_i32 = arith.constant 0 : i32
    %c0_i32_0 = arith.constant 0 : i32
    return %arg0, %c0_i32 : i32, i32
  }
  func.func @transform_1(%arg0: i32) -> (i32, i32) {
    %c0_i32 = arith.constant 0 : i32
    %c0_i32_0 = arith.constant 0 : i32
    %c0_i32_1 = arith.constant 0 : i32
    return %c0_i32, %c0_i32_0 : i32, i32
  }
  func.func @transform_2(%arg0: i32) -> (i32, i32) {
    %c0_i32 = arith.constant 0 : i32
    %c0_i32_0 = arith.constant 0 : i32
    %c0_i32_1 = arith.constant 0 : i32
    return %c0_i32, %c0_i32_0 : i32, i32
  }
  func.func @transform_3(%arg0: i32) -> (i32, i32) {
    %c0_i32 = arith.constant 0 : i32
    %c0_i32_0 = arith.constant 0 : i32
    %c0_i32_1 = arith.constant 0 : i32
    return %c0_i32, %c0_i32_0 : i32, i32
  }
  func.func @transform_4(%arg0: i32) -> (i32, i32) {
    %c0_i32 = arith.constant 0 : i32
    %c0_i32_0 = arith.constant 0 : i32
    %c0_i32_1 = arith.constant 0 : i32
    return %c0_i32, %c0_i32_0 : i32, i32
  }
  func.func @transform_5(%arg0: i32) -> (i32, i32) {
    %c0_i32 = arith.constant 0 : i32
    %c0_i32_0 = arith.constant 0 : i32
    %c0_i32_1 = arith.constant 0 : i32
    return %c0_i32, %c0_i32_0 : i32, i32
  }
  func.func @transform_6(%arg0: i32) -> (i32, i32) {
    %c0_i32 = arith.constant 0 : i32
    %c0_i32_0 = arith.constant 0 : i32
    %c0_i32_1 = arith.constant 0 : i32
    return %c0_i32, %c0_i32_0 : i32, i32
  }
  func.func @transform_7(%arg0: i32) -> (i32, i32) {
    %c0_i32 = arith.constant 0 : i32
    %c0_i32_0 = arith.constant 0 : i32
    %c0_i32_1 = arith.constant 0 : i32
    return %c0_i32, %c0_i32_0 : i32, i32
  }
  func.func @transform_8(%arg0: i32) -> (i32, i32) {
    %c0_i32 = arith.constant 0 : i32
    %c0_i32_0 = arith.constant 0 : i32
    %c0_i32_1 = arith.constant 0 : i32
    return %c0_i32, %c0_i32_0 : i32, i32
  }
  func.func @transform_9(%arg0: i32) -> (i32, i32, i32) {
    %c0_i32 = arith.constant 0 : i32
    %c0_i32_0 = arith.constant 0 : i32
    %c0_i32_1 = arith.constant 0 : i32
    return %arg0, %c0_i32, %c0_i32_0 : i32, i32, i32
  }
}

</mosaic_0001>

<llo_original>
// kernel: tabular_discriminator.1
$region0: #{tabular_discriminator.1}
  #allocation0 [shape = 'u32[]', space=smem, size = 0x4, offset = 0x4, fixed_abs, tag = 'smem constant byte address 0x4 - core index']
  #allocation1 [shape = 'u32[72,128]{1,0:T(1,128)}', space=vmem, size = 0x9000, scoped, tag = 'internal scratch']
  #allocation2 [shape = 'f32[1,1]{1,0:T(1,128)S(1)}', space=vmem, size = 0x200, scoped, tag = 'scoped memory for tabular_discriminator.1']
  %s0 = inlined_call_operand.vmem [shape: f32[16,32], index: 0, kind: input, shape index: {}]
  %s1 = inlined_call_operand.hbm [shape: bf16[32,512], index: 1, kind: input, shape index: {}]
  %s2 = inlined_call_operand.vmem [shape: f32[1,512], index: 2, kind: input, shape index: {}]
  %s3 = inlined_call_operand.hbm [shape: bf16[512,256], index: 3, kind: input, shape index: {}]
  %s4 = inlined_call_operand.vmem [shape: f32[1,256], index: 4, kind: input, shape index: {}]
  %s5 = inlined_call_operand.hbm [shape: bf16[256,128], index: 5, kind: input, shape index: {}]
  %s6 = inlined_call_operand.vmem [shape: f32[1,128], index: 6, kind: input, shape index: {}]
  %s7 = inlined_call_operand.vmem [shape: bf16[8,128], index: 7, kind: input, shape index: {}]
  %s8 = inlined_call_operand.<no memory space> [shape: f32[1,1], index: 8, kind: input, shape index: {}]
  %s9 = inlined_call_operand.vmem [shape: f32[1,1,16], index: 9, kind: output, shape index: {}]
  %s10 = sld [smem:[#allocation0]]
  $region58: #{tabular_discriminator.1} parent=0
    _
  %s12 = ssub.s32 1, %s10
  %s13 = scalar_select 0, %s12, %s10
  %v14 = vstv %s8
  %15 = vst [vmem:[#allocation2] sm:$0x1] %v14
  $region1: #{tabular_discriminator.1} parent=0
    #allocation3 [shape = 'u8[32768]{0}', space=vmem, size = 0x8000, scoped, tag = 'input window, operand 1, single buffered']
    #allocation4 [shape = 's32[1]{0}', space=sflag, size = 0x4, scoped, tag = 'scoped memory for tabular_discriminator.1']
    #allocation5 [shape = 'u8[262144]{0}', space=vmem, size = 0x40000, scoped, tag = 'input window, operand 3, single buffered']
    #allocation6 [shape = 's32[1]{0}', space=sflag, size = 0x4, scoped, tag = 'scoped memory for tabular_discriminator.1']
    #allocation7 [shape = 'u8[65536]{0}', space=vmem, size = 0x10000, scoped, tag = 'input window, operand 5, single buffered']
    %16 = vsyncpa [#allocation4], 0
    %17 = vsyncpa [#allocation6], 0
    // Predicated region
    $region2: #{tabular_discriminator.1} parent=1 // pred_check
      _
    $region3: #{tabular_discriminator.1} parent=1 // pred_check_branch
      %19 = sbr.rel (0) target = $region5
    $region4: #{tabular_discriminator.1} parent=1 // pred_region
      _
    $region5: #{tabular_discriminator.1} parent=1 // pred_fallthru
      _
    // Predicated region
    $region6: #{tabular_discriminator.1} parent=1 // pred_check
      _
    $region7: #{tabular_discriminator.1} parent=1 // pred_check_branch
      %21 = sbr.rel (0) target = $region9
    $region8: #{tabular_discriminator.1} parent=1 // pred_region
      %23 = vsyncadd [#allocation4], 0
      %s24 = sshll.u32 %s1, 4
      %s25 = int_to_ptr.hbm [resolvable:$true] %s24
      %s26 = sshll.u32 [#allocation3], 4
      %s27 = int_to_ptr.vmem [resolvable:$true] %s26
      %32 = dma.hbm_to_vmem [thread:$0]  %s25, 1024, %s27, [#allocation4], 256, 256, 16
    $region9: #{tabular_discriminator.1} parent=1 // pred_fallthru
      _
    // Predicated region
    $region10: #{tabular_discriminator.1} parent=1 // pred_check
      _
    $region11: #{tabular_discriminator.1} parent=1 // pred_check_branch
      %34 = sbr.rel (0) target = $region13
    $region12: #{tabular_discriminator.1} parent=1 // pred_region
      _
    $region13: #{tabular_discriminator.1} parent=1 // pred_fallthru
      _
    // Predicated region
    $region14: #{tabular_discriminator.1} parent=1 // pred_check
      _
    $region15: #{tabular_discriminator.1} parent=1 // pred_check_branch
      %36 = sbr.rel (0) target = $region17
    $region16: #{tabular_discriminator.1} parent=1 // pred_region
      %38 = vsyncadd [#allocation6], 0
      %s39 = sshll.u32 %s3, 4
      %s40 = int_to_ptr.hbm [resolvable:$true] %s39
      %s41 = sshll.u32 [#allocation5], 4
      %s42 = int_to_ptr.vmem [resolvable:$true] %s41
      %47 = dma.hbm_to_vmem [thread:$0]  %s40, 8192, %s42, [#allocation6], 128, 128, 8
    $region17: #{tabular_discriminator.1} parent=1 // pred_fallthru
      _
    // Predicated region
    $region18: #{tabular_discriminator.1} parent=1 // pred_check
      _
    $region19: #{tabular_discriminator.1} parent=1 // pred_check_branch
      %49 = sbr.rel (0) target = $region21
    $region20: #{tabular_discriminator.1} parent=1 // pred_region
      _
    $region21: #{tabular_discriminator.1} parent=1 // pred_fallthru
      _
    // Predicated region
    $region22: #{tabular_discriminator.1} parent=1 // pred_check
      _
    $region23: #{tabular_discriminator.1} parent=1 // pred_check_branch
      %51 = sbr.rel (0) target = $region25
    $region24: #{tabular_discriminator.1} parent=1 // pred_region
      %53 = vsyncadd [#allocation6], 0
      %s54 = sshll.u32 %s5, 4
      %s55 = int_to_ptr.hbm [resolvable:$true] %s54
      %s56 = sshll.u32 [#allocation7], 4
      %s57 = int_to_ptr.vmem [resolvable:$true] %s56
      %62 = dma.hbm_to_vmem [thread:$0]  %s55, 2048, %s57, [#allocation6], 64, 64, 4
    $region25: #{tabular_discriminator.1} parent=1 // pred_fallthru
      _
    // Predicated region
    $region26: #{tabular_discriminator.1} parent=1 // pred_check
      _
    $region27: #{tabular_discriminator.1} parent=1 // pred_check_branch
      %64 = sbr.rel (0) target = $region29
    $region28: #{tabular_discriminator.1} parent=1 // pred_region
      _
    $region29: #{tabular_discriminator.1} parent=1 // pred_fallthru
      _
    // Predicated region
    $region30: #{tabular_discriminator.1} parent=1 // pred_check
      _
    $region31: #{tabular_discriminator.1} parent=1 // pred_check_branch
      %66 = sbr.rel (0) target = $region33
    $region32: #{tabular_discriminator.1} parent=1 // pred_region
      _
    $region33: #{tabular_discriminator.1} parent=1 // pred_fallthru
      _
    // Predicated region
    $region34: #{tabular_discriminator.1} parent=1 // pred_check
      _
    $region35: #{tabular_discriminator.1} parent=1 // pred_check_branch
      %68 = sbr.rel (0) target = $region37
    $region36: #{tabular_discriminator.1} parent=1 // pred_region
      _
    $region37: #{tabular_discriminator.1} parent=1 // pred_fallthru
      _
    // Predicated region
    $region38: #{tabular_discriminator.1} parent=1 // pred_check
      _
    $region39: #{tabular_discriminator.1} parent=1 // pred_check_branch
      %70 = sbr.rel (0) target = $region41
    $region40: #{tabular_discriminator.1} parent=1 // pred_region
      %72 = dma.done [#allocation4], 1024
    $region41: #{tabular_discriminator.1} parent=1 // pred_fallthru
      _
    // Predicated region
    $region42: #{tabular_discriminator.1} parent=1 // pred_check
      _
    $region43: #{tabular_discriminator.1} parent=1 // pred_check_branch
      %74 = sbr.rel (0) target = $region45
    $region44: #{tabular_discriminator.1} parent=1 // pred_region
      %76 = dma.done [#allocation6], 8192
    $region45: #{tabular_discriminator.1} parent=1 // pred_fallthru
      _
    // Predicated region
    $region46: #{tabular_discriminator.1} parent=1 // pred_check
      _
    $region47: #{tabular_discriminator.1} parent=1 // pred_check_branch
      %78 = sbr.rel (0) target = $region49
    $region48: #{tabular_discriminator.1} parent=1 // pred_region
      %80 = dma.done [#allocation6], 2048
    $region49: #{tabular_discriminator.1} parent=1 // pred_fallthru
      _
    %v82 = vld [vmem:[%s0] sm:$0xff]
    %v83 = vld [vmem:[%s0 + $0x8] sm:$0xff]
    %v84 = vpack.c.bf16 %v83, %v82
    %v85 = vld [vmem:[#allocation3] sm:$0xff]
    %v86 = vld [vmem:[#allocation3 + $0x8] sm:$0xff]
    %v87 = vld [vmem:[#allocation3 + $0x10] sm:$0xff]
    %v88 = vld [vmem:[#allocation3 + $0x18] sm:$0xff]
    %v89 = vld [vmem:[#allocation3 + $0x20] sm:$0xff]
    %v90 = vld [vmem:[#allocation3 + $0x28] sm:$0xff]
    %v91 = vld [vmem:[#allocation3 + $0x30] sm:$0xff]
    %v92 = vld [vmem:[#allocation3 + $0x38] sm:$0xff]
    %v93 = vld [vmem:[%s2] sm:$0xf]
    %v95 = vperm.slane %v93, 0
    %v96 = vperm.slane %v93, 1
    %v97 = vperm.slane %v93, 2
    %v98 = vperm.slane %v93, 3
    %v111 = vunpack.c.l.b16 %v85
    %v112 = vunpack.c.h.b16 %v85
    %v113 = vunpack.c.l.b16 %v86
    %v114 = vunpack.c.h.b16 %v86
    %v115 = vunpack.c.l.b16 %v87
    %v116 = vunpack.c.h.b16 %v87
    %v117 = vunpack.c.l.b16 %v88
    %v118 = vunpack.c.h.b16 %v88
    %v119 = vunpack.c.l.b16 %v89
    %v120 = vunpack.c.h.b16 %v89
    %v121 = vunpack.c.l.b16 %v90
    %v122 = vunpack.c.h.b16 %v90
    %v123 = vunpack.c.l.b16 %v91
    %v124 = vunpack.c.h.b16 %v91
    %v125 = vunpack.c.l.b16 %v92
    %v126 = vunpack.c.h.b16 %v92
    %v127 = vpack.c.b16 %v115, %v111
    %v128 = vpack.c.b16 %v116, %v112
    %v129 = vpack.c.b16 %v117, %v113
    %v130 = vpack.c.b16 %v118, %v114
    %v131 = vpack.c.b16 %v123, %v119
    %v132 = vpack.c.b16 %v124, %v120
    %v133 = vpack.c.b16 %v125, %v121
    %v134 = vpack.c.b16 %v126, %v122
    %vm143 = vcmask 261120
    %v145 = vsel %vm143, %v84, 0
    %147 = vmatpush.bf16.msra.mxu0 0
    %148 = vmatpush.bf16.msra.mxu0 0
    %149 = vmatpush.bf16.msra.mxu0 0
    %150 = vmatpush.bf16.msra.mxu0 0
    %151 = vmatpush.bf16.msra.mxu0 0
    %152 = vmatpush.bf16.msra.mxu0 0
    %153 = vmatpush.bf16.msra.mxu0 %v131
    %154 = vmatpush.bf16.msra.mxu0 %v127
    %155 = vmatmul.bf16.gmra.mxu0 %v145
    %v156 = vpop.f32.mrf.mxu0
    %v157 = vadd.f32 %v95, %v156
    %v158 = vpop.f32.mrf.mxu0
    %v159 = vadd.f32 %v95, %v158
    %160 = vdwg.mxu0
    %161 = vmatpush.bf16.msra.mxu0 0
    %162 = vmatpush.bf16.msra.mxu0 0
    %163 = vmatpush.bf16.msra.mxu0 0
    %164 = vmatpush.bf16.msra.mxu0 0
    %165 = vmatpush.bf16.msra.mxu0 0
    %166 = vmatpush.bf16.msra.mxu0 0
    %167 = vmatpush.bf16.msra.mxu0 %v132
    %168 = vmatpush.bf16.msra.mxu0 %v128
    %169 = vmatmul.bf16.gmra.mxu0 %v145
    %v170 = vpop.f32.mrf.mxu0
    %v171 = vadd.f32 %v96, %v170
    %v172 = vpop.f32.mrf.mxu0
    %v173 = vadd.f32 %v96, %v172
    %174 = vdwg.mxu0
    %175 = vmatpush.bf16.msra.mxu0 0
    %176 = vmatpush.bf16.msra.mxu0 0
    %177 = vmatpush.bf16.msra.mxu0 0
    %178 = vmatpush.bf16.msra.mxu0 0
    %179 = vmatpush.bf16.msra.mxu0 0
    %180 = vmatpush.bf16.msra.mxu0 0
    %181 = vmatpush.bf16.msra.mxu0 %v133
    %182 = vmatpush.bf16.msra.mxu0 %v129
    %183 = vmatmul.bf16.gmra.mxu0 %v145
    %v184 = vpop.f32.mrf.mxu0
    %v185 = vadd.f32 %v97, %v184
    %v186 = vpop.f32.mrf.mxu0
    %v187 = vadd.f32 %v97, %v186
    %188 = vdwg.mxu0
    %189 = vmatpush.bf16.msra.mxu0 0
    %190 = vmatpush.bf16.msra.mxu0 0
    %191 = vmatpush.bf16.msra.mxu0 0
    %192 = vmatpush.bf16.msra.mxu0 0
    %193 = vmatpush.bf16.msra.mxu0 0
    %194 = vmatpush.bf16.msra.mxu0 0
    %195 = vmatpush.bf16.msra.mxu0 %v134
    %196 = vmatpush.bf16.msra.mxu0 %v130
    %197 = vmatmul.bf16.gmra.mxu0 %v145
    %v198 = vpop.f32.mrf.mxu0
    %v199 = vadd.f32 %v98, %v198
    %v200 = vpop.f32.mrf.mxu0
    %v201 = vadd.f32 %v98, %v200
    %202 = vdwg.mxu0
    %v203 = vmul.f32 %v157, 0.2
    %v204 = vmul.f32 %v171, 0.2
    %v205 = vmul.f32 %v185, 0.2
    %v206 = vmul.f32 %v199, 0.2
    %v207 = vmul.f32 %v159, 0.2
    %v208 = vmul.f32 %v173, 0.2
    %v209 = vmul.f32 %v187, 0.2
    %v210 = vmul.f32 %v201, 0.2
    %v211 = vmax.f32 %v157, %v203
    %v212 = vmax.f32 %v171, %v204
    %v213 = vmax.f32 %v185, %v205
    %v214 = vmax.f32 %v199, %v206
    %v215 = vmax.f32 %v159, %v207
    %v216 = vmax.f32 %v173, %v208
    %v217 = vmax.f32 %v187, %v209
    %v218 = vmax.f32 %v201, %v210
    %v219 = vpack.c.bf16 %v215, %v211
    %v220 = vpack.c.bf16 %v216, %v212
    %v221 = vpack.c.bf16 %v217, %v213
    %v222 = vpack.c.bf16 %v218, %v214
    %v223 = vld [vmem:[#allocation5] sm:$0xff]
    %v224 = vld [vmem:[#allocation5 + $0x8] sm:$0xff]
    %v225 = vld [vmem:[#allocation5 + $0x10] sm:$0xff]
    %v226 = vld [vmem:[#allocation5 + $0x18] sm:$0xff]
    %v227 = vld [vmem:[#allocation5 + $0x20] sm:$0xff]
    %v228 = vld [vmem:[#allocation5 + $0x28] sm:$0xff]
    %v229 = vld [vmem:[#allocation5 + $0x30] sm:$0xff]
    %v230 = vld [vmem:[#allocation5 + $0x38] sm:$0xff]
    %v231 = vld [vmem:[#allocation5 + $0x40] sm:$0xff]
    %v232 = vld [vmem:[#allocation5 + $0x48] sm:$0xff]
    %v233 = vld [vmem:[#allocation5 + $0x50] sm:$0xff]
    %v234 = vld [vmem:[#allocation5 + $0x58] sm:$0xff]
    %v235 = vld [vmem:[#allocation5 + $0x60] sm:$0xff]
    %v236 = vld [vmem:[#allocation5 + $0x68] sm:$0xff]
    %v237 = vld [vmem:[#allocation5 + $0x70] sm:$0xff]
    %v238 = vld [vmem:[#allocation5 + $0x78] sm:$0xff]
    %v239 = vld [vmem:[#allocation5 + $0x80] sm:$0xff]
    %v240 = vld [vmem:[#allocation5 + $0x88] sm:$0xff]
    %v241 = vld [vmem:[#allocation5 + $0x90] sm:$0xff]
    %v242 = vld [vmem:[#allocation5 + $0x98] sm:$0xff]
    %v243 = vld [vmem:[#allocation5 + $0xa0] sm:$0xff]
    %v244 = vld [vmem:[#allocation5 + $0xa8] sm:$0xff]
    %v245 = vld [vmem:[#allocation5 + $0xb0] sm:$0xff]
    %v246 = vld [vmem:[#allocation5 + $0xb8] sm:$0xff]
    %v247 = vld [vmem:[#allocation5 + $0xc0] sm:$0xff]
    %v248 = vld [vmem:[#allocation5 + $0xc8] sm:$0xff]
    %v249 = vld [vmem:[#allocation5 + $0xd0] sm:$0xff]
    %v250 = vld [vmem:[#allocation5 + $0xd8] sm:$0xff]
    %v251 = vld [vmem:[#allocation5 + $0xe0] sm:$0xff]
    %v252 = vld [vmem:[#allocation5 + $0xe8] sm:$0xff]
    %v253 = vld [vmem:[#allocation5 + $0xf0] sm:$0xff]
    %v254 = vld [vmem:[#allocation5 + $0xf8] sm:$0xff]
    %v255 = vld [vmem:[#allocation5 + $0x100] sm:$0xff]
    %v256 = vld [vmem:[#allocation5 + $0x108] sm:$0xff]
    %v257 = vld [vmem:[#allocation5 + $0x110] sm:$0xff]
    %v258 = vld [vmem:[#allocation5 + $0x118] sm:$0xff]
    %v259 = vld [vmem:[#allocation5 + $0x120] sm:$0xff]
    %v260 = vld [vmem:[#allocation5 + $0x128] sm:$0xff]
    %v261 = vld [vmem:[#allocation5 + $0x130] sm:$0xff]
    %v262 = vld [vmem:[#allocation5 + $0x138] sm:$0xff]
    %v263 = vld [vmem:[#allocation5 + $0x140] sm:$0xff]
    %v264 = vld [vmem:[#allocation5 + $0x148] sm:$0xff]
    %v265 = vld [vmem:[#allocation5 + $0x150] sm:$0xff]
    %v266 = vld [vmem:[#allocation5 + $0x158] sm:$0xff]
    %v267 = vld [vmem:[#allocation5 + $0x160] sm:$0xff]
    %v268 = vld [vmem:[#allocation5 + $0x168] sm:$0xff]
    %v269 = vld [vmem:[#allocation5 + $0x170] sm:$0xff]
    %v270 = vld [vmem:[#allocation5 + $0x178] sm:$0xff]
    %v271 = vld [vmem:[#allocation5 + $0x180] sm:$0xff]
    %v272 = vld [vmem:[#allocation5 + $0x188] sm:$0xff]
    %v273 = vld [vmem:[#allocation5 + $0x190] sm:$0xff]
    %v274 = vld [vmem:[#allocation5 + $0x198] sm:$0xff]
    %v275 = vld [vmem:[#allocation5 + $0x1a0] sm:$0xff]
    %v276 = vld [vmem:[#allocation5 + $0x1a8] sm:$0xff]
    %v277 = vld [vmem:[#allocation5 + $0x1b0] sm:$0xff]
    %v278 = vld [vmem:[#allocation5 + $0x1b8] sm:$0xff]
    %v279 = vld [vmem:[#allocation5 + $0x1c0] sm:$0xff]
    %v280 = vld [vmem:[#allocation5 + $0x1c8] sm:$0xff]
    %v281 = vld [vmem:[#allocation5 + $0x1d0] sm:$0xff]
    %v282 = vld [vmem:[#allocation5 + $0x1d8] sm:$0xff]
    %v283 = vld [vmem:[#allocation5 + $0x1e0] sm:$0xff]
    %v284 = vld [vmem:[#allocation5 + $0x1e8] sm:$0xff]
    %v285 = vld [vmem:[#allocation5 + $0x1f0] sm:$0xff]
    %v286 = vld [vmem:[#allocation5 + $0x1f8] sm:$0xff]
    %v287 = vld [vmem:[%s4] sm:$0x3]
    %v289 = vperm.slane %v287, 0
    %v290 = vperm.slane %v287, 1
    %v357 = vunpack.c.l.b16 %v223
    %v358 = vunpack.c.h.b16 %v223
    %v359 = vunpack.c.l.b16 %v224
    %v360 = vunpack.c.h.b16 %v224
    %v361 = vunpack.c.l.b16 %v225
    %v362 = vunpack.c.h.b16 %v225
    %v363 = vunpack.c.l.b16 %v226
    %v364 = vunpack.c.h.b16 %v226
    %v365 = vunpack.c.l.b16 %v227
    %v366 = vunpack.c.h.b16 %v227
    %v367 = vunpack.c.l.b16 %v228
    %v368 = vunpack.c.h.b16 %v228
    %v369 = vunpack.c.l.b16 %v229
    %v370 = vunpack.c.h.b16 %v229
    %v371 = vunpack.c.l.b16 %v230
    %v372 = vunpack.c.h.b16 %v230
    %v373 = vunpack.c.l.b16 %v231
    %v374 = vunpack.c.h.b16 %v231
    %v375 = vunpack.c.l.b16 %v232
    %v376 = vunpack.c.h.b16 %v232
    %v377 = vunpack.c.l.b16 %v233
    %v378 = vunpack.c.h.b16 %v233
    %v379 = vunpack.c.l.b16 %v234
    %v380 = vunpack.c.h.b16 %v234
    %v381 = vunpack.c.l.b16 %v235
    %v382 = vunpack.c.h.b16 %v235
    %v383 = vunpack.c.l.b16 %v236
    %v384 = vunpack.c.h.b16 %v236
    %v385 = vunpack.c.l.b16 %v237
    %v386 = vunpack.c.h.b16 %v237
    %v387 = vunpack.c.l.b16 %v238
    %v388 = vunpack.c.h.b16 %v238
    %v389 = vunpack.c.l.b16 %v239
    %v390 = vunpack.c.h.b16 %v239
    %v391 = vunpack.c.l.b16 %v240
    %v392 = vunpack.c.h.b16 %v240
    %v393 = vunpack.c.l.b16 %v241
    %v394 = vunpack.c.h.b16 %v241
    %v395 = vunpack.c.l.b16 %v242
    %v396 = vunpack.c.h.b16 %v242
    %v397 = vunpack.c.l.b16 %v243
    %v398 = vunpack.c.h.b16 %v243
    %v399 = vunpack.c.l.b16 %v244
    %v400 = vunpack.c.h.b16 %v244
    %v401 = vunpack.c.l.b16 %v245
    %v402 = vunpack.c.h.b16 %v245
    %v403 = vunpack.c.l.b16 %v246
    %v404 = vunpack.c.h.b16 %v246
    %v405 = vunpack.c.l.b16 %v247
    %v406 = vunpack.c.h.b16 %v247
    %v407 = vunpack.c.l.b16 %v248
    %v408 = vunpack.c.h.b16 %v248
    %v409 = vunpack.c.l.b16 %v249
    %v410 = vunpack.c.h.b16 %v249
    %v411 = vunpack.c.l.b16 %v250
    %v412 = vunpack.c.h.b16 %v250
    %v413 = vunpack.c.l.b16 %v251
    %v414 = vunpack.c.h.b16 %v251
    %v415 = vunpack.c.l.b16 %v252
    %v416 = vunpack.c.h.b16 %v252
    %v417 = vunpack.c.l.b16 %v253
    %v418 = vunpack.c.h.b16 %v253
    %v419 = vunpack.c.l.b16 %v254
    %v420 = vunpack.c.h.b16 %v254
    %v421 = vunpack.c.l.b16 %v255
    %v422 = vunpack.c.h.b16 %v255
    %v423 = vunpack.c.l.b16 %v256
    %v424 = vunpack.c.h.b16 %v256
    %v425 = vunpack.c.l.b16 %v257
    %v426 = vunpack.c.h.b16 %v257
    %v427 = vunpack.c.l.b16 %v258
    %v428 = vunpack.c.h.b16 %v258
    %v429 = vunpack.c.l.b16 %v259
    %v430 = vunpack.c.h.b16 %v259
    %v431 = vunpack.c.l.b16 %v260
    %v432 = vunpack.c.h.b16 %v260
    %v433 = vunpack.c.l.b16 %v261
    %v434 = vunpack.c.h.b16 %v261
    %v435 = vunpack.c.l.b16 %v262
    %v436 = vunpack.c.h.b16 %v262
    %v437 = vunpack.c.l.b16 %v263
    %v438 = vunpack.c.h.b16 %v263
    %v439 = vunpack.c.l.b16 %v264
    %v440 = vunpack.c.h.b16 %v264
    %v441 = vunpack.c.l.b16 %v265
    %v442 = vunpack.c.h.b16 %v265
    %v443 = vunpack.c.l.b16 %v266
    %v444 = vunpack.c.h.b16 %v266
    %v445 = vunpack.c.l.b16 %v267
    %v446 = vunpack.c.h.b16 %v267
    %v447 = vunpack.c.l.b16 %v268
    %v448 = vunpack.c.h.b16 %v268
    %v449 = vunpack.c.l.b16 %v269
    %v450 = vunpack.c.h.b16 %v269
    %v451 = vunpack.c.l.b16 %v270
    %v452 = vunpack.c.h.b16 %v270
    %v453 = vunpack.c.l.b16 %v271
    %v454 = vunpack.c.h.b16 %v271
    %v455 = vunpack.c.l.b16 %v272
    %v456 = vunpack.c.h.b16 %v272
    %v457 = vunpack.c.l.b16 %v273
    %v458 = vunpack.c.h.b16 %v273
    %v459 = vunpack.c.l.b16 %v274
    %v460 = vunpack.c.h.b16 %v274
    %v461 = vunpack.c.l.b16 %v275
    %v462 = vunpack.c.h.b16 %v275
    %v463 = vunpack.c.l.b16 %v276
    %v464 = vunpack.c.h.b16 %v276
    %v465 = vunpack.c.l.b16 %v277
    %v466 = vunpack.c.h.b16 %v277
    %v467 = vunpack.c.l.b16 %v278
    %v468 = vunpack.c.h.b16 %v278
    %v469 = vunpack.c.l.b16 %v279
    %v470 = vunpack.c.h.b16 %v279
    %v471 = vunpack.c.l.b16 %v280
    %v472 = vunpack.c.h.b16 %v280
    %v473 = vunpack.c.l.b16 %v281
    %v474 = vunpack.c.h.b16 %v281
    %v475 = vunpack.c.l.b16 %v282
    %v476 = vunpack.c.h.b16 %v282
    %v477 = vunpack.c.l.b16 %v283
    %v478 = vunpack.c.h.b16 %v283
    %v479 = vunpack.c.l.b16 %v284
    %v480 = vunpack.c.h.b16 %v284
    %v481 = vunpack.c.l.b16 %v285
    %v482 = vunpack.c.h.b16 %v285
    %v483 = vunpack.c.l.b16 %v286
    %v484 = vunpack.c.h.b16 %v286
    %v485 = vpack.c.b16 %v359, %v357
    %v486 = vpack.c.b16 %v360, %v358
    %v487 = vpack.c.b16 %v363, %v361
    %v488 = vpack.c.b16 %v364, %v362
    %v489 = vpack.c.b16 %v367, %v365
    %v490 = vpack.c.b16 %v368, %v366
    %v491 = vpack.c.b16 %v371, %v369
    %v492 = vpack.c.b16 %v372, %v370
    %v493 = vpack.c.b16 %v375, %v373
    %v494 = vpack.c.b16 %v376, %v374
    %v495 = vpack.c.b16 %v379, %v377
    %v496 = vpack.c.b16 %v380, %v378
    %v497 = vpack.c.b16 %v383, %v381
    %v498 = vpack.c.b16 %v384, %v382
    %v499 = vpack.c.b16 %v387, %v385
    %v500 = vpack.c.b16 %v388, %v386
    %v501 = vpack.c.b16 %v391, %v389
    %v502 = vpack.c.b16 %v392, %v390
    %v503 = vpack.c.b16 %v395, %v393
    %v504 = vpack.c.b16 %v396, %v394
    %v505 = vpack.c.b16 %v399, %v397
    %v506 = vpack.c.b16 %v400, %v398
    %v507 = vpack.c.b16 %v403, %v401
    %v508 = vpack.c.b16 %v404, %v402
    %v509 = vpack.c.b16 %v407, %v405
    %v510 = vpack.c.b16 %v408, %v406
    %v511 = vpack.c.b16 %v411, %v409
    %v512 = vpack.c.b16 %v412, %v410
    %v513 = vpack.c.b16 %v415, %v413
    %v514 = vpack.c.b16 %v416, %v414
    %v515 = vpack.c.b16 %v419, %v417
    %v516 = vpack.c.b16 %v420, %v418
    %v517 = vpack.c.b16 %v423, %v421
    %v518 = vpack.c.b16 %v424, %v422
    %v519 = vpack.c.b16 %v427, %v425
    %v520 = vpack.c.b16 %v428, %v426
    %v521 = vpack.c.b16 %v431, %v429
    %v522 = vpack.c.b16 %v432, %v430
    %v523 = vpack.c.b16 %v435, %v433
    %v524 = vpack.c.b16 %v436, %v434
    %v525 = vpack.c.b16 %v439, %v437
    %v526 = vpack.c.b16 %v440, %v438
    %v527 = vpack.c.b16 %v443, %v441
    %v528 = vpack.c.b16 %v444, %v442
    %v529 = vpack.c.b16 %v447, %v445
    %v530 = vpack.c.b16 %v448, %v446
    %v531 = vpack.c.b16 %v451, %v449
    %v532 = vpack.c.b16 %v452, %v450
    %v533 = vpack.c.b16 %v455, %v453
    %v534 = vpack.c.b16 %v456, %v454
    %v535 = vpack.c.b16 %v459, %v457
    %v536 = vpack.c.b16 %v460, %v458
    %v537 = vpack.c.b16 %v463, %v461
    %v538 = vpack.c.b16 %v464, %v462
    %v539 = vpack.c.b16 %v467, %v465
    %v540 = vpack.c.b16 %v468, %v466
    %v541 = vpack.c.b16 %v471, %v469
    %v542 = vpack.c.b16 %v472, %v470
    %v543 = vpack.c.b16 %v475, %v473
    %v544 = vpack.c.b16 %v476, %v474
    %v545 = vpack.c.b16 %v479, %v477
    %v546 = vpack.c.b16 %v480, %v478
    %v547 = vpack.c.b16 %v483, %v481
    %v548 = vpack.c.b16 %v484, %v482
    %613 = vmatpush.bf16.msra.mxu0 %v499
    %614 = vmatpush.bf16.msra.mxu0 %v497
    %615 = vmatpush.bf16.msra.mxu0 %v495
    %616 = vmatpush.bf16.msra.mxu0 %v493
    %617 = vmatpush.bf16.msra.mxu0 %v491
    %618 = vmatpush.bf16.msra.mxu0 %v489
    %619 = vmatpush.bf16.msra.mxu0 %v487
    %620 = vmatpush.bf16.msra.mxu0 %v485
    %621 = vmatmul.bf16.gmra.mxu0 %v219
    %v622 = vpop.f32.mrf.mxu0
    %v623 = vadd.f32 %v289, %v622
    %v624 = vpop.f32.mrf.mxu0
    %v625 = vadd.f32 %v289, %v624
    %626 = vdwg.mxu0
    %627 = vmatpush.bf16.msra.mxu0 %v515
    %628 = vmatpush.bf16.msra.mxu0 %v513
    %629 = vmatpush.bf16.msra.mxu0 %v511
    %630 = vmatpush.bf16.msra.mxu0 %v509
    %631 = vmatpush.bf16.msra.mxu0 %v507
    %632 = vmatpush.bf16.msra.mxu0 %v505
    %633 = vmatpush.bf16.msra.mxu0 %v503
    %634 = vmatpush.bf16.msra.mxu0 %v501
    %635 = vmatmul.bf16.gmra.mxu0 %v220
    %v636 = vpop.f32.mrf.mxu0
    %v637 = vadd.f32 %v623, %v636
    %v638 = vpop.f32.mrf.mxu0
    %v639 = vadd.f32 %v625, %v638
    %640 = vdwg.mxu0
    %641 = vmatpush.bf16.msra.mxu0 %v531
    %642 = vmatpush.bf16.msra.mxu0 %v529
    %643 = vmatpush.bf16.msra.mxu0 %v527
    %644 = vmatpush.bf16.msra.mxu0 %v525
    %645 = vmatpush.bf16.msra.mxu0 %v523
    %646 = vmatpush.bf16.msra.mxu0 %v521
    %647 = vmatpush.bf16.msra.mxu0 %v519
    %648 = vmatpush.bf16.msra.mxu0 %v517
    %649 = vmatmul.bf16.gmra.mxu0 %v221
    %v650 = vpop.f32.mrf.mxu0
    %v651 = vadd.f32 %v637, %v650
    %v652 = vpop.f32.mrf.mxu0
    %v653 = vadd.f32 %v639, %v652
    %654 = vdwg.mxu0
    %655 = vmatpush.bf16.msra.mxu0 %v547
    %656 = vmatpush.bf16.msra.mxu0 %v545
    %657 = vmatpush.bf16.msra.mxu0 %v543
    %658 = vmatpush.bf16.msra.mxu0 %v541
    %659 = vmatpush.bf16.msra.mxu0 %v539
    %660 = vmatpush.bf16.msra.mxu0 %v537
    %661 = vmatpush.bf16.msra.mxu0 %v535
    %662 = vmatpush.bf16.msra.mxu0 %v533
    %663 = vmatmul.bf16.gmra.mxu0 %v222
    %v664 = vpop.f32.mrf.mxu0
    %v665 = vadd.f32 %v651, %v664
    %v666 = vpop.f32.mrf.mxu0
    %v667 = vadd.f32 %v653, %v666
    %668 = vdwg.mxu0
    %669 = vmatpush.bf16.msra.mxu0 %v500
    %670 = vmatpush.bf16.msra.mxu0 %v498
    %671 = vmatpush.bf16.msra.mxu0 %v496
    %672 = vmatpush.bf16.msra.mxu0 %v494
    %673 = vmatpush.bf16.msra.mxu0 %v492
    %674 = vmatpush.bf16.msra.mxu0 %v490
    %675 = vmatpush.bf16.msra.mxu0 %v488
    %676 = vmatpush.bf16.msra.mxu0 %v486
    %677 = vmatmul.bf16.gmra.mxu0 %v219
    %v678 = vpop.f32.mrf.mxu0
    %v679 = vadd.f32 %v290, %v678
    %v680 = vpop.f32.mrf.mxu0
    %v681 = vadd.f32 %v290, %v680
    %682 = vdwg.mxu0
    %683 = vmatpush.bf16.msra.mxu0 %v516
    %684 = vmatpush.bf16.msra.mxu0 %v514
    %685 = vmatpush.bf16.msra.mxu0 %v512
    %686 = vmatpush.bf16.msra.mxu0 %v510
    %687 = vmatpush.bf16.msra.mxu0 %v508
    %688 = vmatpush.bf16.msra.mxu0 %v506
    %689 = vmatpush.bf16.msra.mxu0 %v504
    %690 = vmatpush.bf16.msra.mxu0 %v502
    %691 = vmatmul.bf16.gmra.mxu0 %v220
    %v692 = vpop.f32.mrf.mxu0
    %v693 = vadd.f32 %v679, %v692
    %v694 = vpop.f32.mrf.mxu0
    %v695 = vadd.f32 %v681, %v694
    %696 = vdwg.mxu0
    %697 = vmatpush.bf16.msra.mxu0 %v532
    %698 = vmatpush.bf16.msra.mxu0 %v530
    %699 = vmatpush.bf16.msra.mxu0 %v528
    %700 = vmatpush.bf16.msra.mxu0 %v526
    %701 = vmatpush.bf16.msra.mxu0 %v524
    %702 = vmatpush.bf16.msra.mxu0 %v522
    %703 = vmatpush.bf16.msra.mxu0 %v520
    %704 = vmatpush.bf16.msra.mxu0 %v518
    %705 = vmatmul.bf16.gmra.mxu0 %v221
    %v706 = vpop.f32.mrf.mxu0
    %v707 = vadd.f32 %v693, %v706
    %v708 = vpop.f32.mrf.mxu0
    %v709 = vadd.f32 %v695, %v708
    %710 = vdwg.mxu0
    %711 = vmatpush.bf16.msra.mxu0 %v548
    %712 = vmatpush.bf16.msra.mxu0 %v546
    %713 = vmatpush.bf16.msra.mxu0 %v544
    %714 = vmatpush.bf16.msra.mxu0 %v542
    %715 = vmatpush.bf16.msra.mxu0 %v540
    %716 = vmatpush.bf16.msra.mxu0 %v538
    %717 = vmatpush.bf16.msra.mxu0 %v536
    %718 = vmatpush.bf16.msra.mxu0 %v534
    %719 = vmatmul.bf16.gmra.mxu0 %v222
    %v720 = vpop.f32.mrf.mxu0
    %v721 = vadd.f32 %v707, %v720
    %v722 = vpop.f32.mrf.mxu0
    %v723 = vadd.f32 %v709, %v722
    %724 = vdwg.mxu0
    %v725 = vmul.f32 %v665, 0.2
    %v726 = vmul.f32 %v721, 0.2
    %v727 = vmul.f32 %v667, 0.2
    %v728 = vmul.f32 %v723, 0.2
    %v729 = vmax.f32 %v665, %v725
    %v730 = vmax.f32 %v721, %v726
    %v731 = vmax.f32 %v667, %v727
    %v732 = vmax.f32 %v723, %v728
    %v733 = vpack.c.bf16 %v731, %v729
    %v734 = vpack.c.bf16 %v732, %v730
    %v735 = vld [vmem:[#allocation7] sm:$0xf]
    %v736 = vld [vmem:[#allocation7 + $0x4] sm:$0xf]
    %v737 = vld [vmem:[#allocation7 + $0x8] sm:$0xf]
    %v738 = vld [vmem:[#allocation7 + $0xc] sm:$0xf]
    %v739 = vld [vmem:[#allocation7 + $0x10] sm:$0xf]
    %v740 = vld [vmem:[#allocation7 + $0x14] sm:$0xf]
    %v741 = vld [vmem:[#allocation7 + $0x18] sm:$0xf]
    %v742 = vld [vmem:[#allocation7 + $0x1c] sm:$0xf]
    %v743 = vld [vmem:[#allocation7 + $0x20] sm:$0xf]
    %v744 = vld [vmem:[#allocation7 + $0x24] sm:$0xf]
    %v745 = vld [vmem:[#allocation7 + $0x28] sm:$0xf]
    %v746 = vld [vmem:[#allocation7 + $0x2c] sm:$0xf]
    %v747 = vld [vmem:[#allocation7 + $0x30] sm:$0xf]
    %v748 = vld [vmem:[#allocation7 + $0x34] sm:$0xf]
    %v749 = vld [vmem:[#allocation7 + $0x38] sm:$0xf]
    %v750 = vld [vmem:[#allocation7 + $0x3c] sm:$0xf]
    %v751 = vld [vmem:[#allocation7 + $0x40] sm:$0xf]
    %v752 = vld [vmem:[#allocation7 + $0x44] sm:$0xf]
    %v753 = vld [vmem:[#allocation7 + $0x48] sm:$0xf]
    %v754 = vld [vmem:[#allocation7 + $0x4c] sm:$0xf]
    %v755 = vld [vmem:[#allocation7 + $0x50] sm:$0xf]
    %v756 = vld [vmem:[#allocation7 + $0x54] sm:$0xf]
    %v757 = vld [vmem:[#allocation7 + $0x58] sm:$0xf]
    %v758 = vld [vmem:[#allocation7 + $0x5c] sm:$0xf]
    %v759 = vld [vmem:[#allocation7 + $0x60] sm:$0xf]
    %v760 = vld [vmem:[#allocation7 + $0x64] sm:$0xf]
    %v761 = vld [vmem:[#allocation7 + $0x68] sm:$0xf]
    %v762 = vld [vmem:[#allocation7 + $0x6c] sm:$0xf]
    %v763 = vld [vmem:[#allocation7 + $0x70] sm:$0xf]
    %v764 = vld [vmem:[#allocation7 + $0x74] sm:$0xf]
    %v765 = vld [vmem:[#allocation7 + $0x78] sm:$0xf]
    %v766 = vld [vmem:[#allocation7 + $0x7c] sm:$0xf]
    %v767 = vld [vmem:[%s6] sm:$0x1]
    %v769 = vperm.slane %v767, 0
    %v803 = vunpack.c.l.b16 %v735
    %v804 = vunpack.c.l.b16 %v736
    %v805 = vunpack.c.l.b16 %v737
    %v806 = vunpack.c.l.b16 %v738
    %v807 = vunpack.c.l.b16 %v739
    %v808 = vunpack.c.l.b16 %v740
    %v809 = vunpack.c.l.b16 %v741
    %v810 = vunpack.c.l.b16 %v742
    %v811 = vunpack.c.l.b16 %v743
    %v812 = vunpack.c.l.b16 %v744
    %v813 = vunpack.c.l.b16 %v745
    %v814 = vunpack.c.l.b16 %v746
    %v815 = vunpack.c.l.b16 %v747
    %v816 = vunpack.c.l.b16 %v748
    %v817 = vunpack.c.l.b16 %v749
    %v818 = vunpack.c.l.b16 %v750
    %v819 = vunpack.c.l.b16 %v751
    %v820 = vunpack.c.l.b16 %v752
    %v821 = vunpack.c.l.b16 %v753
    %v822 = vunpack.c.l.b16 %v754
    %v823 = vunpack.c.l.b16 %v755
    %v824 = vunpack.c.l.b16 %v756
    %v825 = vunpack.c.l.b16 %v757
    %v826 = vunpack.c.l.b16 %v758
    %v827 = vunpack.c.l.b16 %v759
    %v828 = vunpack.c.l.b16 %v760
    %v829 = vunpack.c.l.b16 %v761
    %v830 = vunpack.c.l.b16 %v762
    %v831 = vunpack.c.l.b16 %v763
    %v832 = vunpack.c.l.b16 %v764
    %v833 = vunpack.c.l.b16 %v765
    %v834 = vunpack.c.l.b16 %v766
    %v835 = vpack.c.b16 %v804, %v803
    %v836 = vpack.c.b16 %v806, %v805
    %v837 = vpack.c.b16 %v808, %v807
    %v838 = vpack.c.b16 %v810, %v809
    %v839 = vpack.c.b16 %v812, %v811
    %v840 = vpack.c.b16 %v814, %v813
    %v841 = vpack.c.b16 %v816, %v815
    %v842 = vpack.c.b16 %v818, %v817
    %v843 = vpack.c.b16 %v820, %v819
    %v844 = vpack.c.b16 %v822, %v821
    %v845 = vpack.c.b16 %v824, %v823
    %v846 = vpack.c.b16 %v826, %v825
    %v847 = vpack.c.b16 %v828, %v827
    %v848 = vpack.c.b16 %v830, %v829
    %v849 = vpack.c.b16 %v832, %v831
    %v850 = vpack.c.b16 %v834, %v833
    %867 = vmatpush.bf16.msra.mxu0 %v842
    %868 = vmatpush.bf16.msra.mxu0 %v841
    %869 = vmatpush.bf16.msra.mxu0 %v840
    %870 = vmatpush.bf16.msra.mxu0 %v839
    %871 = vmatpush.bf16.msra.mxu0 %v838
    %872 = vmatpush.bf16.msra.mxu0 %v837
    %873 = vmatpush.bf16.msra.mxu0 %v836
    %874 = vmatpush.bf16.msra.mxu0 %v835
    %875 = vmatmul.bf16.gmra.mxu0 %v733
    %v876 = vpop.f32.mrf.mxu0
    %v877 = vadd.f32 %v769, %v876
    %v878 = vpop.f32.mrf.mxu0
    %v879 = vadd.f32 %v769, %v878
    %880 = vdwg.mxu0
    %881 = vmatpush.bf16.msra.mxu0 %v850
    %882 = vmatpush.bf16.msra.mxu0 %v849
    %883 = vmatpush.bf16.msra.mxu0 %v848
    %884 = vmatpush.bf16.msra.mxu0 %v847
    %885 = vmatpush.bf16.msra.mxu0 %v846
    %886 = vmatpush.bf16.msra.mxu0 %v845
    %887 = vmatpush.bf16.msra.mxu0 %v844
    %888 = vmatpush.bf16.msra.mxu0 %v843
    %889 = vmatmul.bf16.gmra.mxu0 %v734
    %v890 = vpop.f32.mrf.mxu0
    %v891 = vadd.f32 %v877, %v890
    %v892 = vpop.f32.mrf.mxu0
    %v893 = vadd.f32 %v879, %v892
    %894 = vdwg.mxu0
    %v895 = vmul.f32 %v891, 0.2
    %v896 = vmul.f32 %v893, 0.2
    %v897 = vmax.f32 %v891, %v895
    %v898 = vmax.f32 %v893, %v896
    %v899 = vld [vmem:[%s7] sm:$0xf]
    %v900 = vpack.c.bf16 %v898, %v897
    %901 = vmatpush.bf16.xpose.msra.mxu0 0
    %902 = vmatpush.bf16.xpose.msra.mxu0 0
    %903 = vmatpush.bf16.xpose.msra.mxu0 0
    %904 = vmatpush.bf16.xpose.msra.mxu0 0
    %905 = vmatpush.bf16.xpose.msra.mxu0 0
    %906 = vmatpush.bf16.xpose.msra.mxu0 0
    %907 = vmatpush.bf16.xpose.msra.mxu0 0
    %908 = vmatpush.bf16.xpose.msra.mxu0 %v900
    %909 = vmatmul.bf16.gmra.mxu0 %v899
    %v910 = vpop.f32.mrf.mxu0
    %v911 = vadd.f32 0.0, %v910
    %v912 = vpop.f32.mrf.mxu0
    %913 = vdwg.mxu0
    %v914 = vld [vmem:[#allocation2] sm:$0x1]
    %916 = vset.pattern.permute.xlu0 0
    %917 = vperm.xlu0 %916, %v914
    %v918 = vpop.permute.xlu0 %917
    %v920 = vperm.slane %v918, 0
    %v921 = vadd.f32 %v911, %v920
    %v922 = vxor.u32 %v921, 2147483648
    %v923 = vmul.f32 %v922, 1.442695
    %v924 = vpow.pop %v923
    %v925 = vadd.f32 %v924, 1.0
    %v926 = vrcp.pop %v925
    %v927 = vmul.f32 %v925, %v926
    %v928 = vsub.f32 1.0, %v927
    %v929 = vmul.f32 %v926, %v928
    %v930 = vadd.f32 %v926, %v929
    %vm931 = vweird.f32 %v925
    %vm932 = vweird.f32 %v926
    %vm933 = vmor %vm931, %vm932
    %v934 = vsel %vm933, %v926, %v930
    %v935 = vand.u32 2147483647, %v925
    %vm936 = vcmp.eq.f32.partialorder %v935, 8.507059e+37
    %v937 = vand.u32 %v925, 2147483648
    %v938 = vor.u32 1.1754944e-38, %v937
    %v939 = vsel %vm936, %v938, %v934
    %v940 = vmul.f32 1.0, %v939
    %vm941 = vcmask 122880
    %942 = vst.msk [vmem:[%s9] sm:$0x1] %vm941, %v940
    // Predicated region
    $region50: #{tabular_discriminator.1} parent=1 // pred_check
      _
    $region51: #{tabular_discriminator.1} parent=1 // pred_check_branch
      %944 = sbr.rel (0) target = $region53
    $region52: #{tabular_discriminator.1} parent=1 // pred_region
      _
    $region53: #{tabular_discriminator.1} parent=1 // pred_fallthru
      _
    // Predicated region
    $region54: #{tabular_discriminator.1} parent=1 // pred_check
      _
    $region55: #{tabular_discriminator.1} parent=1 // pred_check_branch
      %946 = sbr.rel (0) target = $region57
    $region56: #{tabular_discriminator.1} parent=1 // pred_region
      _
    $region57: #{tabular_discriminator.1} parent=1 // pred_fallthru
      _
    %947 = vsyncpa [#allocation4], 1
    %948 = vsyncpa [#allocation6], 1

</llo_original>
